<compile_context>
chip_gen: v5e
topology: v5e:2x2
jax: 0.10.0
libtpu: 0.0.40
codegen_flags: <defaults>
</compile_context>

<pallas_src>
import jax
import jax.numpy as jnp
from jax.experimental import pallas as pl
from jax.experimental.pallas import tpu as pltpu


def _ct_kernel(x_ref, lut_ref, o_ref):
    """x_ref: (1,1,1,T) f32 in [0,1]; lut_ref: (1,32,16) bf16 (two stacked
    planes of lut/255 for one channel); o_ref: (1,1,1,T) f32."""
    x = x_ref[0, 0]                                          # (1, T) f32

    # Quantize: idx = clamp(round(x*255), 0, 255); small-integer math is exact
    # in f32.  Split idx = 16*hi + lo.
    q = jnp.clip(jnp.round(x * 255.0), 0.0, 255.0)           # integer-valued f32
    hi = jnp.floor(q * 0.0625)                               # 0..15 (exact)
    lo = q - 16.0 * hi                                       # 0..15 (exact)

    # (16,1) comparison iota, broadcast along lanes (never materialize (16,T)).
    iota16 = jax.lax.broadcasted_iota(jnp.int32, (16, 1), 0).astype(jnp.float32)

    # Level 1: 16-wide one-hot on the low nibble (exact in bf16), gathered with
    # a SINGLE bf16 MXU pass against both LUT planes at once; f32 accumulation.
    onehot_lo = (iota16 == lo).astype(jnp.bfloat16)          # (16, T) bf16
    r = jnp.dot(lut_ref[0], onehot_lo,                       # (32,16)@(16,T)
                preferred_element_type=jnp.float32)          # -> (32, T) f32
    t = r[:16, :] + r[16:, :]                                # two-plane sum, (16,T)

    # Level 2: pick the row matching the high nibble, sublane-reduce 16 rows.
    picked = jnp.where(iota16 == hi, t, 0.0)                 # (16, T)
    o_ref[0, 0] = jnp.sum(picked, axis=0, keepdims=True)     # (1, T) direct store


def _pick_hw_tile(hw, max_tile):
    """Lane-dense tile (multiple of 128) that, whenever possible, divides HW
    exactly so no wrapper pad/slice HBM pass is needed."""
    max_tile = max(128, (int(max_tile) // 128) * 128)
    if hw <= max_tile:
        return pl.cdiv(hw, 128) * 128            # single (maybe padded) tile
    for t in range(max_tile, 1023, -128):        # largest 128-aligned divisor
        if hw % t == 0:
            return t
    return max_tile                              # ragged HW -> padded fallback


def cumulative_transform(x_nchw, ctlut, *, max_hw_tile=8192):
    """Equivalent of CumulativeTransform(ctlut, untransform=True)(x).

    x_nchw: (N, C, H, W) float32 in [0, 1]
    ctlut:  (256, C) float32 LUT (values in [0, 255])
    returns (N, C, H, W) float32 in [0, 1]
    """
    N, C, H, W = x_nchw.shape
    HW = H * W
    assert ctlut.shape == (256, C)

    hw_tile = _pick_hw_tile(HW, max_hw_tile)
    n_tiles = pl.cdiv(HW, hw_tile)
    hw_pad = n_tiles * hw_tile

    # Dummy size-1 axis keeps the block's second-minor dim == full array dim.
    x_flat = x_nchw.reshape(N, C, 1, HW).astype(jnp.float32)
    if hw_pad != HW:
        # Rare fallback (ragged HW): zero padding maps to lut[0]; padded lanes
        # are sliced off below.
        x_flat = jnp.pad(x_flat, ((0, 0), (0, 0), (0, 0), (0, hw_pad - HW)))

    # lut3[c, hi, lo] = ctlut[16*hi + lo, c] / 255 (final /255 folded in).
    # Split into bf16 value + bf16 residual planes -> one exact-enough bf16
    # MXU pass (error <= 2^-17) instead of 6 f32 passes.
    lut3 = (jnp.asarray(ctlut, jnp.float32).T / 255.0).reshape(C, 16, 16)
    lut_hi = lut3.astype(jnp.bfloat16)
    lut_res = (lut3 - lut_hi.astype(jnp.float32)).astype(jnp.bfloat16)
    lut_planes = jnp.concatenate([lut_hi, lut_res], axis=1)  # (C, 32, 16) bf16

    out = pl.pallas_call(
        _ct_kernel,
        out_shape=jax.ShapeDtypeStruct((N, C, 1, hw_pad), jnp.float32),
        grid_spec=pltpu.PrefetchScalarGridSpec(
            num_scalar_prefetch=0,
            grid=(N, C, n_tiles),
            in_specs=[
                pl.BlockSpec((1, 1, 1, hw_tile), lambda n, c, t: (n, c, 0, t)),
                pl.BlockSpec((1, 32, 16), lambda n, c, t: (c, 0, 0)),  # LUT planes
            ],
            out_specs=pl.BlockSpec((1, 1, 1, hw_tile), lambda n, c, t: (n, c, 0, t)),
        ),
        compiler_params=pltpu.CompilerParams(
            dimension_semantics=("parallel", "parallel", "parallel"),
            vmem_limit_bytes=32 * 1024 * 1024,
        ),
    )(x_flat, lut_planes)

    out = out.reshape(N, C, hw_pad)
    if hw_pad != HW:
        out = out[:, :, :HW]
    return out.reshape(N, C, H, W)


if __name__ == "__main__":
    # Deterministic setup (synthetic LUT; no checkpoint loading).
    N, C, H, W = 2, 4, 16, 16

    # Per-channel gamma-curve LUTs, shape (256, C), values in [0, 255].
    levels = jnp.arange(256, dtype=jnp.float32) / 255.0
    gammas = jnp.array([0.5, 1.0, 1.5, 2.2], dtype=jnp.float32)
    ctlut = (255.0 * levels[:, None] ** gammas[None, :]).astype(jnp.float32)

    key = jax.random.PRNGKey(0)
    x = jax.random.uniform(key, (N, C, H, W), dtype=jnp.float32)

    y = jax.block_until_ready(cumulative_transform(x, ctlut))

    # Pure-JAX reference of the PyTorch forward (untransform=True).
    idx = jnp.clip(jnp.round(x * 255.0), 0.0, 255.0).astype(jnp.int32)  # (N,C,H,W)
    ch = jnp.arange(C).reshape(1, C, 1, 1)
    ref = ctlut[idx, ch].astype(jnp.float32) / 255.0

    assert y.shape == x.shape and y.dtype == jnp.float32
    err = float(jnp.max(jnp.abs(y - ref)))
    assert err < 1e-5, err

    print("KERNEL_OK")
</pallas_src>

<mosaic_0001>
module attributes {stable_mosaic.version = 11 : i64} {
  func.func @_ct_kernel(%arg0: i32, %arg1: i32, %arg2: i32, %arg3: memref<1x1x1x256xf32, #tpu.memory_space<vmem>>, %arg4: memref<1x32x16xbf16, #tpu.memory_space<vmem>>, %arg5: memref<1x1x1x256xf32, #tpu.memory_space<vmem>>) attributes {dimension_semantics = [#tpu.dimension_semantics<parallel>, #tpu.dimension_semantics<parallel>, #tpu.dimension_semantics<parallel>], iteration_bounds = array<i64: 2, 4, 1>, scalar_prefetch = 0 : i64, scratch_operands = 0 : i64, tpu.core_type = #tpu.core_type<tc>, window_params = [{transform_indices = @transform_0, window_bounds = array<i64: 1, 1, 1, 256>}, {transform_indices = @transform_1, window_bounds = array<i64: 1, 32, 16>}, {transform_indices = @transform_2, window_bounds = array<i64: 1, 1, 1, 256>}]} {
    %c0 = arith.constant 0 : index
    %c0_0 = arith.constant 0 : index
    %c0_1 = arith.constant 0 : index
    %c0_2 = arith.constant 0 : index
    %0 = vector.load %arg3[%c0, %c0_0, %c0_1, %c0_2] : memref<1x1x1x256xf32, #tpu.memory_space<vmem>>, vector<1x1x1x256xf32>
    %1 = vector.shape_cast %0 : vector<1x1x1x256xf32> to vector<1x256xf32>
    %cst = arith.constant 2.550000e+02 : f32
    %2 = vector.broadcast %cst : f32 to vector<1x256xf32>
    %3 = arith.mulf %1, %2 : vector<1x256xf32>
    %4 = math.roundeven %3 : vector<1x256xf32>
    %cst_3 = arith.constant 0.000000e+00 : f32
    %cst_4 = arith.constant 2.550000e+02 : f32
    %5 = vector.broadcast %cst_3 : f32 to vector<1x256xf32>
    %6 = arith.maximumf %5, %4 : vector<1x256xf32>
    %7 = vector.broadcast %cst_4 : f32 to vector<1x256xf32>
    %8 = arith.minimumf %7, %6 : vector<1x256xf32>
    %cst_5 = arith.constant 6.250000e-02 : f32
    %9 = vector.broadcast %cst_5 : f32 to vector<1x256xf32>
    %10 = arith.mulf %8, %9 : vector<1x256xf32>
    %11 = math.floor %10 : vector<1x256xf32>
    %cst_6 = arith.constant 1.600000e+01 : f32
    %12 = vector.broadcast %cst_6 : f32 to vector<1x256xf32>
    %13 = arith.mulf %12, %11 : vector<1x256xf32>
    %14 = arith.subf %8, %13 : vector<1x256xf32>
    %15 = tpu.iota {dimensions = array<i32: 0>} : vector<16x1xi32>
    %16 = arith.sitofp %15 : vector<16x1xi32> to vector<16x1xf32>
    %17 = vector.broadcast %16 : vector<16x1xf32> to vector<16x256xf32>
    %18 = vector.broadcast %14 : vector<1x256xf32> to vector<16x256xf32>
    %19 = arith.cmpf oeq, %17, %18 : vector<16x256xf32>
    %20 = arith.extui %19 : vector<16x256xi1> to vector<16x256xi32>
    %21 = arith.sitofp %20 : vector<16x256xi32> to vector<16x256xf32>
    %22 = arith.truncf %21 : vector<16x256xf32> to vector<16x256xbf16>
    %c0_7 = arith.constant 0 : index
    %c0_8 = arith.constant 0 : index
    %c0_9 = arith.constant 0 : index
    %23 = vector.load %arg4[%c0_7, %c0_8, %c0_9] : memref<1x32x16xbf16, #tpu.memory_space<vmem>>, vector<1x32x16xbf16>
    %24 = vector.shape_cast %23 : vector<1x32x16xbf16> to vector<32x16xbf16>
    %cst_10 = arith.constant dense<0.000000e+00> : vector<32x256xf32>
    %25 = tpu.matmul %24, %22, %cst_10 {dimension_numbers = #tpu.dot_dimension_numbers<[1], [0], [0], [1], [0, 0, 1, 1], [], []>} : vector<32x16xbf16>, vector<16x256xbf16>, vector<32x256xf32> -> vector<32x256xf32>
    %26 = vector.extract_strided_slice %25 {offsets = [0, 0], sizes = [16, 256], strides = [1, 1]} : vector<32x256xf32> to vector<16x256xf32>
    %27 = vector.extract_strided_slice %25 {offsets = [16, 0], sizes = [16, 256], strides = [1, 1]} : vector<32x256xf32> to vector<16x256xf32>
    %28 = arith.addf %26, %27 : vector<16x256xf32>
    %29 = vector.broadcast %16 : vector<16x1xf32> to vector<16x256xf32>
    %30 = vector.broadcast %11 : vector<1x256xf32> to vector<16x256xf32>
    %31 = arith.cmpf oeq, %29, %30 : vector<16x256xf32>
    %cst_11 = arith.constant 0.000000e+00 : f32
    %32 = vector.broadcast %cst_11 : f32 to vector<16x256xf32>
    %33 = arith.select %31, %28, %32 : vector<16x256xi1>, vector<16x256xf32>
    %cst_12 = arith.constant dense<0.000000e+00> : vector<256xf32>
    %34 = vector.multi_reduction <add>, %33, %cst_12 [0] : vector<16x256xf32> to vector<256xf32>
    %35 = vector.shape_cast %34 : vector<256xf32> to vector<1x256xf32>
    %c0_13 = arith.constant 0 : index
    %c0_14 = arith.constant 0 : index
    %c0_15 = arith.constant 0 : index
    %c0_16 = arith.constant 0 : index
    %36 = vector.load %arg5[%c0_13, %c0_14, %c0_15, %c0_16] : memref<1x1x1x256xf32, #tpu.memory_space<vmem>>, vector<1x1x1x256xf32>
    %37 = vector.shape_cast %36 : vector<1x1x1x256xf32> to vector<1x256xf32>
    %38 = vector.shape_cast %35 : vector<1x256xf32> to vector<1x1x1x256xf32>
    tpu.vector_store %arg5[%c0_13, %c0_14, %c0_15, %c0_16], %38 {strides = array<i32>} : memref<1x1x1x256xf32, #tpu.memory_space<vmem>>, vector<1x1x1x256xf32>,
    return
  }
  func.func @transform_0(%arg0: i32, %arg1: i32, %arg2: i32) -> (i32, i32, i32, i32) {
    %c0_i32 = arith.constant 0 : i32
    %c0_i32_0 = arith.constant 0 : i32
    return %arg0, %arg1, %c0_i32, %arg2 : i32, i32, i32, i32
  }
  func.func @transform_1(%arg0: i32, %arg1: i32, %arg2: i32) -> (i32, i32, i32) {
    %c0_i32 = arith.constant 0 : i32
    %c0_i32_0 = arith.constant 0 : i32
    %c0_i32_1 = arith.constant 0 : i32
    return %arg1, %c0_i32, %c0_i32_0 : i32, i32, i32
  }
  func.func @transform_2(%arg0: i32, %arg1: i32, %arg2: i32) -> (i32, i32, i32, i32) {
    %c0_i32 = arith.constant 0 : i32
    %c0_i32_0 = arith.constant 0 : i32
    return %arg0, %arg1, %c0_i32, %arg2 : i32, i32, i32, i32
  }
}

</mosaic_0001>

<llo_original>
// kernel: tpu_custom_call.1
$region0: #{tpu_custom_call.1}
  #allocation0 [shape = 'u32[]', space=smem, size = 0x4, offset = 0x4, fixed_abs, tag = 'smem constant byte address 0x4 - core index']
  #allocation1 [shape = 'u32[72,128]{1,0:T(1,128)}', space=vmem, size = 0x9000, scoped, tag = 'internal scratch']
  %s0 = inlined_call_operand.vmem [shape: f32[2,4,1,256], index: 0, kind: input, shape index: {}]
  %s1 = inlined_call_operand.vmem [shape: bf16[4,32,16], index: 1, kind: input, shape index: {}]
  %s2 = inlined_call_operand.hbm [shape: f32[2,4,1,256], index: 2, kind: output, shape index: {}]
  %s3 = sld [smem:[#allocation0]]
  $region41: #{tpu_custom_call.1} parent=0
    _
  %s5 = ssub.s32 1, %s3
  %s6 = scalar_select 0, %s5, %s3
  $region1: #{tpu_custom_call.1} parent=0
    #allocation2 [shape = 'u8[2048]{0}', space=vmem, size = 0x800, scoped, tag = 'output window, operand 0']
    #allocation3 [shape = 's32[2]{0}', space=sflag, size = 0x8, scoped, tag = 'scoped memory for tpu_custom_call.1']
    %7 = vsyncpa [#allocation3], 0
    %s8 = scalar_lea.sflag [#allocation3], 1
    %9 = vsyncpa %s8, 0
    loop: start=0, step=1, limit=10
    $region2: #{tpu_custom_call.1} parent=1 // loop_pre_header
      _
    $region3: #{tpu_custom_call.1} parent=1 // loop_header
      %s11 = sphi 0, %s15
      %p12 = scmp.ge.s32.totalorder %s11, 10
      %s18 = sphi 0, %s37
      %s19 = sphi 0, %s33
      %s20 = sphi 0, %s29
      %s21 = sphi 0, %s18
      %s22 = sphi 0, %s19
      %s23 = sphi 0, %s20
      %s24 = sphi 0, %s21
      %s25 = sphi 0, %s22
      %s26 = sphi 0, %s23
      %s44 = sphi 0, %s46
      %s47 = sphi 0, %s44
      %s48 = sphi 0, %s47
      %s64 = sphi 0, %s48
      %s70 = sphi 0, %s72
      %s73 = sphi 0, %s70
      %s74 = sphi 0, %s73
      %s90 = sphi 0, %s74
      %s100 = sphi 0, %s102
      %s103 = sphi 0, %s100
      %s104 = sphi 0, %s103
      %s120 = sphi 0, %s104
    $region4: #{tpu_custom_call.1} parent=1 // loop_header_branch
      %14 = sbr.rel (%p12) target = $region8
    $region5: #{tpu_custom_call.1} parent=1 // loop_body
      %s16 = ssub.s32 %s11, 1
      %s17 = ssub.s32 %s11, 2
      %s27 = sadd.s32 1, %s20
      %p28 = scmp.ge.s32.totalorder %s27, 1
      %s29 = scalar_select %p28, 0, %s27
      %s30 = sadd.s32 1, %s19
      %s31 = scalar_select %p28, %s30, %s19
      %p32 = scmp.ge.s32.totalorder %s31, 4
      %s33 = scalar_select %p32, 0, %s31
      %s34 = sadd.s32 1, %s18
      %s35 = scalar_select %p32, %s34, %s18
      %p36 = scmp.ge.s32.totalorder %s35, 2
      %s37 = scalar_select %p36, 0, %s35
      %s38 = ssub.s32 %s18, %s37
      %s39 = ssub.s32 %s19, %s33
      %s40 = sor.u32 %s38, %s39
      %s41 = ssub.s32 %s20, %s29
      %s42 = sor.u32 %s40, %s41
      %p43 = scmp.eq.s32.totalorder %s42, 0
      %s45 = sadd.s32 %s44, 1
      %s46 = scalar_select %p43, %s44, %s45
      %p49 = pneg %p43
      %p50 = scmp.eq.s32.totalorder %s11, 7
      %p51 = por %p49, %p50
      %p52 = scmp.ne.s32.totalorder %s44, %s47
      %p53 = scmp.eq.s32.totalorder %s11, 0
      %p54 = por %p52, %p53
      %p55 = scmp.ne.s32.totalorder %s44, %s47
      %p56 = scmp.eq.s32.totalorder %s16, 7
      %p57 = por %p55, %p56
      %p58 = scmp.ne.s32.totalorder %s47, %s48
      %p59 = scmp.eq.s32.totalorder %s16, 0
      %p60 = por %p58, %p59
      %p61 = scmp.ne.s32.totalorder %s47, %s48
      %p62 = scmp.eq.s32.totalorder %s17, 7
      %p63 = por %p61, %p62
      %p65 = scmp.ne.s32.totalorder %s48, %s64
      %p66 = scmp.eq.s32.totalorder %s17, 0
      %p67 = por %p65, %p66
      %s68 = ssub.s32 %s19, %s33
      %p69 = scmp.eq.s32.totalorder %s68, 0
      %s71 = sadd.s32 %s70, 1
      %s72 = scalar_select %p69, %s70, %s71
      %p75 = pneg %p69
      %p76 = scmp.eq.s32.totalorder %s11, 7
      %p77 = por %p75, %p76
      %p78 = scmp.ne.s32.totalorder %s70, %s73
      %p79 = scmp.eq.s32.totalorder %s11, 0
      %p80 = por %p78, %p79
      %p81 = scmp.ne.s32.totalorder %s70, %s73
      %p82 = scmp.eq.s32.totalorder %s16, 7
      %p83 = por %p81, %p82
      %p84 = scmp.ne.s32.totalorder %s73, %s74
      %p85 = scmp.eq.s32.totalorder %s16, 0
      %p86 = por %p84, %p85
      %p87 = scmp.ne.s32.totalorder %s73, %s74
      %p88 = scmp.eq.s32.totalorder %s17, 7
      %p89 = por %p87, %p88
      %p91 = scmp.ne.s32.totalorder %s74, %s90
      %p92 = scmp.eq.s32.totalorder %s17, 0
      %p93 = por %p91, %p92
      %s94 = ssub.s32 %s18, %s37
      %s95 = ssub.s32 %s19, %s33
      %s96 = sor.u32 %s94, %s95
      %s97 = ssub.s32 %s20, %s29
      %s98 = sor.u32 %s96, %s97
      %p99 = scmp.eq.s32.totalorder %s98, 0
      %s101 = sadd.s32 %s100, 1
      %s102 = scalar_select %p99, %s100, %s101
      %p105 = pneg %p99
      %p106 = scmp.eq.s32.totalorder %s11, 7
      %p107 = por %p105, %p106
      %p108 = scmp.ne.s32.totalorder %s100, %s103
      %p109 = scmp.eq.s32.totalorder %s11, 0
      %p110 = por %p108, %p109
      %p111 = scmp.ne.s32.totalorder %s100, %s103
      %p112 = scmp.eq.s32.totalorder %s16, 7
      %p113 = por %p111, %p112
      %p114 = scmp.ne.s32.totalorder %s103, %s104
      %p115 = scmp.eq.s32.totalorder %s16, 0
      %p116 = por %p114, %p115
      %p117 = scmp.ne.s32.totalorder %s103, %s104
      %p118 = scmp.eq.s32.totalorder %s17, 7
      %p119 = por %p117, %p118
      %p121 = scmp.ne.s32.totalorder %s104, %s120
      %p122 = scmp.eq.s32.totalorder %s17, 0
      %p123 = por %p121, %p122
      %p124 = scmp.le.s32.totalorder 1, %s11
      %p125 = scmp.lt.s32.totalorder %s11, 9
      %p126 = pnand %p124, %p125
      %p127 = pneg %p126
      // Predicated region
      $region9: #{tpu_custom_call.1} parent=5 // pred_check
        _
      $region10: #{tpu_custom_call.1} parent=5 // pred_check_branch
        %129 = sbr.rel (%p126) target = $region12
      $region11: #{tpu_custom_call.1} parent=5 // pred_region
        %s130 = ssub.s32 %s11, 1
      $region12: #{tpu_custom_call.1} parent=5 // pred_fallthru
        _
      %p131 = scmp.lt.s32.totalorder %s11, 8
      // Predicated region
      $region13: #{tpu_custom_call.1} parent=5 // pred_check
        %p132 = pneg %p131
      $region14: #{tpu_custom_call.1} parent=5 // pred_check_branch
        %134 = sbr.rel (%p132) target = $region16
      $region15: #{tpu_custom_call.1} parent=5 // pred_region
        // Predicated region
        $region17: #{tpu_custom_call.1} parent=15 // pred_check
          %p135 = pneg %p54
        $region18: #{tpu_custom_call.1} parent=15 // pred_check_branch
          %137 = sbr.rel (%p135) target = $region20
        $region19: #{tpu_custom_call.1} parent=15 // pred_region
          %s138 = smul.u32 2, %s20
          %p139 = scmp.lt.s32.totalorder %s18, 1
          %s140 = scalar_select %p139, %s18, 1
          %p141 = scmp.lt.s32.totalorder %s19, 3
          %s142 = scalar_select %p141, %s19, 3
          %p143 = scmp.lt.s32.totalorder %s138, 1
          %s144 = scalar_select %p143, %s138, 1
          %s145 = smul.addr %s142, 2
          %s146 = sadd.s32 %s144, %s145
          %s147 = smul.addr %s140, 8
          %s148 = sadd.s32 %s146, %s147
          %s149 = scalar_lea.vmem %s0, %s148
          %s150 = smul.u32 2, %s20
        $region20: #{tpu_custom_call.1} parent=15 // pred_fallthru
          _
        // Predicated region
        $region21: #{tpu_custom_call.1} parent=15 // pred_check
          %p151 = pneg %p80
        $region22: #{tpu_custom_call.1} parent=15 // pred_check_branch
          %153 = sbr.rel (%p151) target = $region24
        $region23: #{tpu_custom_call.1} parent=15 // pred_region
          %p154 = scmp.lt.s32.totalorder %s19, 3
          %s155 = scalar_select %p154, %s19, 3
          %s156 = smul.addr %s155, 4
          %s157 = smul.addr %s156, 4
          %s158 = scalar_lea.vmem %s1, %s157
        $region24: #{tpu_custom_call.1} parent=15 // pred_fallthru
          _
      $region16: #{tpu_custom_call.1} parent=5 // pred_fallthru
        _
      %p159 = scmp.le.s32.totalorder 1, %s11
      %p160 = scmp.lt.s32.totalorder %s11, 9
      %p161 = pnand %p159, %p160
      %p162 = pneg %p161
      // Predicated region
      $region25: #{tpu_custom_call.1} parent=5 // pred_check
        _
      $region26: #{tpu_custom_call.1} parent=5 // pred_check_branch
        %164 = sbr.rel (%p161) target = $region28
      $region27: #{tpu_custom_call.1} parent=5 // pred_region
        %s165 = ssub.s32 %s11, 1
        %s166 = smul.u32 2, %s23
        %p167 = scmp.lt.s32.totalorder %s21, 1
        %s168 = scalar_select %p167, %s21, 1
        %p169 = scmp.lt.s32.totalorder %s22, 3
        %s170 = scalar_select %p169, %s22, 3
        %p171 = scmp.lt.s32.totalorder %s166, 1
        %s172 = scalar_select %p171, %s166, 1
        %s173 = smul.addr %s170, 2
        %s174 = sadd.s32 %s172, %s173
        %s175 = smul.addr %s168, 8
        %s176 = sadd.s32 %s174, %s175
        %s177 = scalar_lea.vmem %s0, %s176
        %p178 = pneg %p60
        %p179 = pneg %p57
        %p180 = scmp.lt.s32.totalorder %s22, 3
        %s181 = scalar_select %p180, %s22, 3
        %s182 = smul.addr %s181, 4
        %s183 = smul.addr %s182, 4
        %s184 = scalar_lea.vmem %s1, %s183
        %p185 = pneg %p86
        %p186 = pneg %p83
        %p187 = pneg %p116
        %p188 = pneg %p113
        %s189 = sand.u32 %s103, 1
        %s190 = scalar_lea.sflag [#allocation3], %s189
        %s191 = sand.u32 %s103, 1
        %s192 = smul.addr %s191, 2
        %s193 = scalar_lea.vmem [#allocation2], %s192
        %s194 = smul.u32 2, %s23
        %p195 = scmp.lt.s32.totalorder %s21, 1
        %s196 = scalar_select %p195, %s21, 1
        %p197 = scmp.lt.s32.totalorder %s22, 3
        %s198 = scalar_select %p197, %s22, 3
        %p199 = scmp.lt.s32.totalorder %s194, 1
        %s200 = scalar_select %p199, %s194, 1
        %s201 = smul.addr %s198, 2
        %s202 = sadd.s32 %s200, %s201
        %s203 = smul.addr %s196, 8
        %s204 = sadd.s32 %s202, %s203
        %s205 = scalar_lea.vmem %s0, %s204
        %s206 = smul.u32 2, %s23
        %p207 = scmp.lt.s32.totalorder %s22, 3
        %s208 = scalar_select %p207, %s22, 3
        %s209 = smul.addr %s208, 4
        %s210 = smul.addr %s209, 4
        %s211 = scalar_lea.vmem %s1, %s210
        %s212 = smul.u32 2, %s23
        %v214 = vld [vmem:[%s205] sm:$0x3]
        %v215 = vmul.f32 %v214, 255.0
        %v216 = vround.ne.pseudo %v215
        %v217 = vmax.f32 %v216, 0.0
        %v218 = vmin.f32 %v217, 255.0
        %v219 = vmul.f32 %v218, 0.0625
        %v220 = vfloor.f32 %v219
        %v221 = vmul.f32 %v220, 16.0
        %v222 = vsub.f32 %v218, %v221
        %v223 = vlaneseq
        %v224 = vshrl.u32 %v223, 7
        %v225 = vadd.s32 %v224, 8
        %v226 = vcvt.s32.f32 %v224
        %v227 = vcvt.s32.f32 %v225
        %v229 = vperm.slane %v222, 0
        %v230 = vperm.slane %v222, 1
        %vm233 = vcmp.eq.f32.partialorder %v226, %v229
        %vm234 = vcmp.eq.f32.partialorder %v226, %v230
        %vm235 = vcmp.eq.f32.partialorder %v227, %v229
        %vm236 = vcmp.eq.f32.partialorder %v227, %v230
        %v237 = vsel %vm233, 1, 0
        %v238 = vsel %vm234, 1, 0
        %v239 = vsel %vm235, 1, 0
        %v240 = vsel %vm236, 1, 0
        %v241 = vcvt.s32.f32 %v237
        %v242 = vcvt.s32.f32 %v238
        %v243 = vcvt.s32.f32 %v239
        %v244 = vcvt.s32.f32 %v240
        %v245 = vpack.c.bf16 %v243, %v241
        %v246 = vpack.c.bf16 %v244, %v242
        %v247 = vld [vmem:[%s211] sm:$0xf]
        %v248 = vld [vmem:[%s211 + $0x4] sm:$0xf]
        %v249 = vld [vmem:[%s211 + $0x8] sm:$0xf]
        %v250 = vld [vmem:[%s211 + $0xc] sm:$0xf]
        %v255 = vunpack.c.l.b16 %v247
        %v256 = vunpack.c.l.b16 %v248
        %v257 = vunpack.c.l.b16 %v249
        %v258 = vunpack.c.l.b16 %v250
        %v259 = vpack.c.b16 %v256, %v255
        %v260 = vpack.c.b16 %v258, %v257
        %vm261 = vcmask 130048
        %v263 = vsel %vm261, %v259, 0
        %v266 = vsel %vm261, %v260, 0
        %268 = vmatpush.bf16.msra.mxu0 0
        %269 = vmatpush.bf16.msra.mxu0 0
        %270 = vmatpush.bf16.msra.mxu0 0
        %271 = vmatpush.bf16.msra.mxu0 0
        %272 = vmatpush.bf16.msra.mxu0 0
        %273 = vmatpush.bf16.msra.mxu0 0
        %274 = vmatpush.bf16.msra.mxu0 0
        %275 = vmatpush.bf16.msra.mxu0 %v245
        %276 = vmatmul.bf16.gmra.mxu0 %v263
        %v277 = vpop.f32.mrf.mxu0
        %v278 = vadd.f32 0.0, %v277
        %v279 = vpop.f32.mrf.mxu0
        %v280 = vadd.f32 0.0, %v279
        %281 = vmatmul.bf16.gmra.mxu0 %v266
        %v282 = vpop.f32.mrf.mxu0
        %v283 = vadd.f32 0.0, %v282
        %v284 = vpop.f32.mrf.mxu0
        %v285 = vadd.f32 0.0, %v284
        %286 = vdwg.mxu0
        %287 = vmatpush.bf16.msra.mxu0 0
        %288 = vmatpush.bf16.msra.mxu0 0
        %289 = vmatpush.bf16.msra.mxu0 0
        %290 = vmatpush.bf16.msra.mxu0 0
        %291 = vmatpush.bf16.msra.mxu0 0
        %292 = vmatpush.bf16.msra.mxu0 0
        %293 = vmatpush.bf16.msra.mxu0 0
        %294 = vmatpush.bf16.msra.mxu0 %v246
        %295 = vmatmul.bf16.gmra.mxu0 %v263
        %v296 = vpop.f32.mrf.mxu0
        %v297 = vadd.f32 0.0, %v296
        %v298 = vpop.f32.mrf.mxu0
        %v299 = vadd.f32 0.0, %v298
        %300 = vmatmul.bf16.gmra.mxu0 %v266
        %v301 = vpop.f32.mrf.mxu0
        %v302 = vadd.f32 0.0, %v301
        %v303 = vpop.f32.mrf.mxu0
        %v304 = vadd.f32 0.0, %v303
        %305 = vdwg.mxu0
        %v306 = vadd.f32 %v278, %v283
        %v307 = vadd.f32 %v297, %v302
        %v308 = vadd.f32 %v280, %v285
        %v309 = vadd.f32 %v299, %v304
        %v311 = vperm.slane %v220, 0
        %v312 = vperm.slane %v220, 1
        %vm315 = vcmp.eq.f32.partialorder %v226, %v311
        %vm316 = vcmp.eq.f32.partialorder %v226, %v312
        %vm317 = vcmp.eq.f32.partialorder %v227, %v311
        %vm318 = vcmp.eq.f32.partialorder %v227, %v312
        %v319 = vsel %vm315, %v306, 0.0
        %v320 = vsel %vm316, %v307, 0.0
        %v321 = vsel %vm317, %v308, 0.0
        %v322 = vsel %vm318, %v309, 0.0
        %v323 = vadd.f32 %v319, %v321
        %v324 = vrot.slane %v323, 4
        %v325 = vadd.f32 %v323, %v324
        %v326 = vrot.slane %v325, 2
        %v327 = vadd.f32 %v325, %v326
        %v328 = vrot.slane %v327, 1
        %v329 = vadd.f32 %v327, %v328
        %v330 = vadd.f32 %v320, %v322
        %v331 = vrot.slane %v330, 4
        %v332 = vadd.f32 %v330, %v331
        %v333 = vrot.slane %v332, 2
        %v334 = vadd.f32 %v332, %v333
        %v335 = vrot.slane %v334, 1
        %v336 = vadd.f32 %v334, %v335
        %v339 = vrot.slane %v336, 7
        %vm340 = vcmask 1040384
        %v341 = vsel %vm340, %v329, %v339
        %v343 = vlaneseq
        %vm344 = vcmp.ge.s32.totalorder %v343, 0
        %vm345 = vcmp.lt.s32.totalorder %v343, 256
        %vm346 = vmand %vm344, %vm345
        %347 = vst.msk [vmem:[%s193] sm:$0x3] %vm346, %v341
        %s348 = sand.u32 %s103, 1
        %s349 = scalar_lea.sflag [#allocation3], %s348
        %s350 = sand.u32 %s103, 1
        %s351 = smul.addr %s350, 2
        %s352 = scalar_lea.vmem [#allocation2], %s351
        // Predicated region
        $region29: #{tpu_custom_call.1} parent=27 // pred_check
          %p353 = pneg %p113
        $region30: #{tpu_custom_call.1} parent=27 // pred_check_branch
          %355 = sbr.rel (%p353) target = $region32
        $region31: #{tpu_custom_call.1} parent=27 // pred_region
          %s356 = smul.u32 2, %s23
          %358 = vsyncadd %s349, 0
          %s359 = smul.addr %s22, 2
          %s360 = sadd.s32 %s356, %s359
          %s361 = smul.addr %s21, 8
          %s362 = sadd.s32 %s360, %s361
          %s363 = scalar_lea.hbm %s2, %s362
          %s365 = sshll.u32 %s352, 4
          %s366 = int_to_ptr.vmem [resolvable:$true] %s365
          %s367 = sshll.u32 %s363, 4
          %s368 = int_to_ptr.hbm [resolvable:$true] %s367
          %370 = dma.vmem_to_hbm [thread:$0]  %s366, 32, %s368, %s349
        $region32: #{tpu_custom_call.1} parent=27 // pred_fallthru
          _
      $region28: #{tpu_custom_call.1} parent=5 // pred_fallthru
        _
      %p371 = scmp.le.s32.totalorder 2, %s11
      // Predicated region
      $region33: #{tpu_custom_call.1} parent=5 // pred_check
        %p372 = pneg %p371
      $region34: #{tpu_custom_call.1} parent=5 // pred_check_branch
        %374 = sbr.rel (%p372) target = $region36
      $region35: #{tpu_custom_call.1} parent=5 // pred_region
        %s375 = ssub.s32 %s11, 2
        // Predicated region
        $region37: #{tpu_custom_call.1} parent=35 // pred_check
          %p376 = pneg %p119
        $region38: #{tpu_custom_call.1} parent=35 // pred_check_branch
          %378 = sbr.rel (%p376) target = $region40
        $region39: #{tpu_custom_call.1} parent=35 // pred_region
          %s379 = sand.u32 %s104, 1
          %s380 = scalar_lea.sflag [#allocation3], %s379
          %s381 = sand.u32 %s104, 1
          %s382 = smul.addr %s381, 2
          %s383 = scalar_lea.vmem [#allocation2], %s382
          %385 = dma.done %s380, 32
        $region40: #{tpu_custom_call.1} parent=35 // pred_fallthru
          _
      $region36: #{tpu_custom_call.1} parent=5 // pred_fallthru
        _
    $region6: #{tpu_custom_call.1} parent=1 // loop_footer
      %s15 = sadd.s32 1, %s11
    $region7: #{tpu_custom_call.1} parent=1 // loop_footer_branch
      %10 = sbr.rel target = $region3
    $region8: #{tpu_custom_call.1} parent=1 // loop_exit
      _
    %386 = vsyncpa [#allocation3], 1
    %s387 = scalar_lea.sflag [#allocation3], 1
    %388 = vsyncpa %s387, 1

</llo_original>
